<compile_context>
chip_gen: v7x
topology: tpu7x:2x2x1
jax: 0.10.0
libtpu: 0.0.40
codegen_flags: <defaults>
</compile_context>

<pallas_src>
import jax
import jax.numpy as jnp
from jax.experimental import pallas as pl
from jax.experimental.pallas import tpu as pltpu


def gcn_kernel(h_ref, attn_ref, src_ref, dst_ref, rel_ref, atte_ref,
               wn_ref, bn_ref, wr_ref, br_ref,
               wah_ref, waz_ref, ba_ref,
               out_ref):
    f32 = jnp.float32
    N = h_ref.shape[0]
    E = src_ref.shape[0]

    # --- apply_nodes: h = node_fc(h) --------------------------------------
    h1 = jnp.dot(h_ref[...], wn_ref[...], preferred_element_type=f32) + bn_ref[...]   # [N, in]

    # --- build incidence matrices in VMEM from index vectors (VPU, no HBM) --
    node_ids = jax.lax.broadcasted_iota(jnp.int32, (E, N), 1)                          # [E, N]
    S = (node_ids == src_ref[...]).astype(f32)                                         # [E, N]
    D = (node_ids == dst_ref[...]).astype(f32)                                         # [E, N]

    # --- message z1: per-edge att[u]*h[u] + att[v]*h[v] == (S+D) @ (att*h) --
    ah = attn_ref[...] * h1                                                            # [N, in]
    z1 = jnp.dot(S + D, ah, preferred_element_type=f32)                                # [E, in]

    # --- message z2: e_att * rel_fc(rel) ----------------------------------
    relp = jnp.dot(rel_ref[...], wr_ref[...], preferred_element_type=f32) + br_ref[...]  # [E, rel]
    z2 = atte_ref[...] * relp                                                          # [E, rel]

    # --- reduce: h_sum = D^T @ [z1 | z2]   (single fused scatter-add) -------
    z = jnp.concatenate([z1, z2], axis=1)                                              # [E, in+rel]
    hsum = jax.lax.dot_general(D, z,
                               dimension_numbers=(((0,), (0,)), ((), ())),
                               preferred_element_type=f32)                             # [N, in+rel]

    # --- apply_fc(cat([h1, h_sum])) + relu  (weight pre-split wah | waz) -----
    out = (jnp.dot(h1,   wah_ref[...], preferred_element_type=f32)
           + jnp.dot(hsum, waz_ref[...], preferred_element_type=f32)
           + ba_ref[...])                                                              # [N, out_pad]
    out_ref[...] = jnp.maximum(out, 0.0)


def image_gcn_layer(h, att_n, src, dst, rel, att_e, params):
    """Batched graphs.
    h: [B,N,in]  att_n: [B,N,1]  src/dst: [B,E] int32  rel: [B,E,rel]  att_e: [B,E,1]."""
    B, N, in_dims = h.shape
    _, E, rel_dims = rel.shape
    wn, bn, wr, br, wa, ba = params
    out_dims = wa.shape[1]
    out_pad = pl.cdiv(out_dims, 128) * 128        # lane-dense output store

    # Index vectors shipped as [B, E, 1] int32 (incidence matrices are built in-kernel).
    src2 = src.astype(jnp.int32)[..., None]
    dst2 = dst.astype(jnp.int32)[..., None]

    # Zero-pad apply_fc to 128 output lanes and split along its input dim
    # consistent with cat([h1, h_sum]).
    wa_pad = jnp.zeros((wa.shape[0], out_pad), jnp.float32).at[:, :out_dims].set(wa)
    ba_pad = jnp.zeros((1, out_pad), jnp.float32).at[:, :out_dims].set(ba)
    wah = wa_pad[:in_dims]                                            # [in,      out_pad]
    waz = wa_pad[in_dims:]                                            # [in+rel,  out_pad]

    per_graph = lambda d1, d2: pl.BlockSpec((None, d1, d2), lambda b: (b, 0, 0))
    shared = lambda shp: pl.BlockSpec(shp, lambda b: tuple(0 for _ in shp))

    in_specs = [per_graph(N, in_dims),      # h
                per_graph(N, 1),            # att_n
                per_graph(E, 1),            # src indices
                per_graph(E, 1),            # dst indices
                per_graph(E, rel_dims),     # rel
                per_graph(E, 1),            # att_e
                shared(wn.shape), shared(bn.shape),
                shared(wr.shape), shared(br.shape),
                shared(wah.shape), shared(waz.shape), shared(ba_pad.shape)]

    out_full = pl.pallas_call(
        gcn_kernel,
        out_shape=jax.ShapeDtypeStruct((B, N, out_pad), jnp.float32),
        grid=(B,),
        in_specs=in_specs,
        out_specs=per_graph(N, out_pad),
        compiler_params=pltpu.CompilerParams(
            dimension_semantics=("parallel",)),     # shards batch across TCs on v7x
    )(h, att_n, src2, dst2, rel, att_e, wn, bn, wr, br, wah, waz, ba_pad)

    return out_full[:, :, :out_dims]


def reference(h, att_n, src, dst, rel, att_e, params):
    """Pure-JAX replica of the DGL/PyTorch forward (per graph, then stacked)."""
    wn, bn, wr, br, wa, ba = params

    def one(hb, ab, sb, db, rb, aeb):
        N = hb.shape[0]
        h1 = hb @ wn + bn
        z1 = ab[sb] * h1[sb] + ab[db] * h1[db]
        z2 = aeb * (rb @ wr + br)
        msg = jnp.concatenate([z1, z2], axis=1)
        h_sum = jax.ops.segment_sum(msg, db, num_segments=N)
        feat = jnp.concatenate([h1, h_sum], axis=1)
        return jax.nn.relu(feat @ wa + ba)

    return jnp.stack([one(h[b], att_n[b], src[b], dst[b], rel[b], att_e[b])
                      for b in range(h.shape[0])])


def init_params(key, in_dims, rel_dims, out_dims):
    """nn.Linear-style init (uniform +-1/sqrt(fan_in)); weights pre-transposed [fan_in, fan_out]."""
    ks = jax.random.split(key, 6)

    def lin(kw, kb, fi, fo):
        s = 1.0 / jnp.sqrt(fi)
        w = jax.random.uniform(kw, (fi, fo), jnp.float32, -s, s)
        b = jax.random.uniform(kb, (1, fo), jnp.float32, -s, s)
        return w, b

    wn, bn = lin(ks[0], ks[1], in_dims, in_dims)                       # node_fc
    wr, br = lin(ks[2], ks[3], rel_dims, rel_dims)                     # rel_fc
    wa, ba = lin(ks[4], ks[5], 2 * in_dims + rel_dims, out_dims)       # apply_fc
    return wn, bn, wr, br, wa, ba


if __name__ == "__main__":
    B, N, E = 4, 16, 32              # graphs per call, nodes (regions), edges
    in_dims, rel_dims, out_dims = 32, 16, 32

    key = jax.random.PRNGKey(0)
    k_h, k_an, k_rel, k_ae, k_s, k_d, k_p = jax.random.split(key, 7)

    h     = jax.random.normal(k_h,  (B, N, in_dims), jnp.float32)
    att_n = jax.random.uniform(k_an, (B, N, 1), jnp.float32)           # node attention scalars
    rel   = jax.random.normal(k_rel, (B, E, rel_dims), jnp.float32)    # edge relation features
    att_e = jax.random.uniform(k_ae, (B, E, 1), jnp.float32)           # edge attention scalars

    # Deterministic random connectivity per graph.
    src = jax.random.randint(k_s, (B, E), 0, N, jnp.int32)
    dst = jax.random.randint(k_d, (B, E), 0, N, jnp.int32)

    params = init_params(k_p, in_dims, rel_dims, out_dims)

    out = jax.block_until_ready(image_gcn_layer(h, att_n, src, dst, rel, att_e, params))
    ref = reference(h, att_n, src, dst, rel, att_e, params)

    assert out.shape == (B, N, out_dims)
    assert jnp.allclose(out, ref, atol=1e-4, rtol=1e-4), "mismatch vs. pure-JAX reference"

    print("KERNEL_OK")
</pallas_src>

<mosaic_0001>
module attributes {stable_mosaic.version = 11 : i64} {
  func.func @gcn_kernel(%arg0: i32, %arg1: memref<1x16x32xf32, #tpu.memory_space<vmem>>, %arg2: memref<1x16x1xf32, #tpu.memory_space<vmem>>, %arg3: memref<1x32x1xi32, #tpu.memory_space<vmem>>, %arg4: memref<1x32x1xi32, #tpu.memory_space<vmem>>, %arg5: memref<1x32x16xf32, #tpu.memory_space<vmem>>, %arg6: memref<1x32x1xf32, #tpu.memory_space<vmem>>, %arg7: memref<32x32xf32, #tpu.memory_space<vmem>>, %arg8: memref<1x32xf32, #tpu.memory_space<vmem>>, %arg9: memref<16x16xf32, #tpu.memory_space<vmem>>, %arg10: memref<1x16xf32, #tpu.memory_space<vmem>>, %arg11: memref<32x128xf32, #tpu.memory_space<vmem>>, %arg12: memref<48x128xf32, #tpu.memory_space<vmem>>, %arg13: memref<1x128xf32, #tpu.memory_space<vmem>>, %arg14: memref<1x16x128xf32, #tpu.memory_space<vmem>>) attributes {dimension_semantics = [#tpu.dimension_semantics<parallel>], iteration_bounds = array<i64: 4>, scalar_prefetch = 0 : i64, scratch_operands = 0 : i64, tpu.core_type = #tpu.core_type<tc>, window_params = [{transform_indices = @transform_0, window_bounds = array<i64: 1, 16, 32>}, {transform_indices = @transform_1, window_bounds = array<i64: 1, 16, 1>}, {transform_indices = @transform_2, window_bounds = array<i64: 1, 32, 1>}, {transform_indices = @transform_3, window_bounds = array<i64: 1, 32, 1>}, {transform_indices = @transform_4, window_bounds = array<i64: 1, 32, 16>}, {transform_indices = @transform_5, window_bounds = array<i64: 1, 32, 1>}, {pipeline_mode = #tpu.pipeline_mode<synchronous>, transform_indices = @transform_6, window_bounds = array<i64: 32, 32>}, {pipeline_mode = #tpu.pipeline_mode<synchronous>, transform_indices = @transform_7, window_bounds = array<i64: 1, 32>}, {pipeline_mode = #tpu.pipeline_mode<synchronous>, transform_indices = @transform_8, window_bounds = array<i64: 16, 16>}, {pipeline_mode = #tpu.pipeline_mode<synchronous>, transform_indices = @transform_9, window_bounds = array<i64: 1, 16>}, {pipeline_mode = #tpu.pipeline_mode<synchronous>, transform_indices = @transform_10, window_bounds = array<i64: 32, 128>}, {pipeline_mode = #tpu.pipeline_mode<synchronous>, transform_indices = @transform_11, window_bounds = array<i64: 48, 128>}, {pipeline_mode = #tpu.pipeline_mode<synchronous>, transform_indices = @transform_12, window_bounds = array<i64: 1, 128>}, {transform_indices = @transform_13, window_bounds = array<i64: 1, 16, 128>}]} {
    %c0 = arith.constant 0 : index
    %c0_0 = arith.constant 0 : index
    %c0_1 = arith.constant 0 : index
    %0 = vector.load %arg1[%c0, %c0_0, %c0_1] : memref<1x16x32xf32, #tpu.memory_space<vmem>>, vector<1x16x32xf32>
    %1 = vector.shape_cast %0 : vector<1x16x32xf32> to vector<16x32xf32>
    %c0_2 = arith.constant 0 : index
    %c0_3 = arith.constant 0 : index
    %2 = vector.load %arg7[%c0_2, %c0_3] : memref<32x32xf32, #tpu.memory_space<vmem>>, vector<32x32xf32>
    %cst = arith.constant dense<0.000000e+00> : vector<16x32xf32>
    %3 = tpu.matmul %1, %2, %cst {dimension_numbers = #tpu.dot_dimension_numbers<[1], [0], [0], [1], [0, 0, 1, 1], [], []>} : vector<16x32xf32>, vector<32x32xf32>, vector<16x32xf32> -> vector<16x32xf32>
    %c0_4 = arith.constant 0 : index
    %c0_5 = arith.constant 0 : index
    %4 = vector.load %arg8[%c0_4, %c0_5] : memref<1x32xf32, #tpu.memory_space<vmem>>, vector<1x32xf32>
    %5 = vector.broadcast %4 : vector<1x32xf32> to vector<16x32xf32>
    %6 = arith.addf %3, %5 : vector<16x32xf32>
    %7 = tpu.iota {dimensions = array<i32: 1>} : vector<32x16xi32>
    %c0_6 = arith.constant 0 : index
    %c0_7 = arith.constant 0 : index
    %c0_8 = arith.constant 0 : index
    %8 = vector.load %arg3[%c0_6, %c0_7, %c0_8] : memref<1x32x1xi32, #tpu.memory_space<vmem>>, vector<1x32x1xi32>
    %9 = vector.shape_cast %8 : vector<1x32x1xi32> to vector<32x1xi32>
    %10 = vector.broadcast %9 : vector<32x1xi32> to vector<32x16xi32>
    %11 = arith.cmpi eq, %7, %10 : vector<32x16xi32>
    %12 = arith.extui %11 : vector<32x16xi1> to vector<32x16xi32>
    %13 = arith.sitofp %12 : vector<32x16xi32> to vector<32x16xf32>
    %c0_9 = arith.constant 0 : index
    %c0_10 = arith.constant 0 : index
    %c0_11 = arith.constant 0 : index
    %14 = vector.load %arg4[%c0_9, %c0_10, %c0_11] : memref<1x32x1xi32, #tpu.memory_space<vmem>>, vector<1x32x1xi32>
    %15 = vector.shape_cast %14 : vector<1x32x1xi32> to vector<32x1xi32>
    %16 = vector.broadcast %15 : vector<32x1xi32> to vector<32x16xi32>
    %17 = arith.cmpi eq, %7, %16 : vector<32x16xi32>
    %18 = arith.extui %17 : vector<32x16xi1> to vector<32x16xi32>
    %19 = arith.sitofp %18 : vector<32x16xi32> to vector<32x16xf32>
    %c0_12 = arith.constant 0 : index
    %c0_13 = arith.constant 0 : index
    %c0_14 = arith.constant 0 : index
    %20 = vector.load %arg2[%c0_12, %c0_13, %c0_14] : memref<1x16x1xf32, #tpu.memory_space<vmem>>, vector<1x16x1xf32>
    %21 = vector.shape_cast %20 : vector<1x16x1xf32> to vector<16x1xf32>
    %22 = vector.broadcast %21 : vector<16x1xf32> to vector<16x32xf32>
    %23 = arith.mulf %22, %6 : vector<16x32xf32>
    %24 = arith.addf %13, %19 : vector<32x16xf32>
    %cst_15 = arith.constant dense<0.000000e+00> : vector<32x32xf32>
    %25 = tpu.matmul %24, %23, %cst_15 {dimension_numbers = #tpu.dot_dimension_numbers<[1], [0], [0], [1], [0, 0, 1, 1], [], []>} : vector<32x16xf32>, vector<16x32xf32>, vector<32x32xf32> -> vector<32x32xf32>
    %c0_16 = arith.constant 0 : index
    %c0_17 = arith.constant 0 : index
    %c0_18 = arith.constant 0 : index
    %26 = vector.load %arg5[%c0_16, %c0_17, %c0_18] : memref<1x32x16xf32, #tpu.memory_space<vmem>>, vector<1x32x16xf32>
    %27 = vector.shape_cast %26 : vector<1x32x16xf32> to vector<32x16xf32>
    %c0_19 = arith.constant 0 : index
    %c0_20 = arith.constant 0 : index
    %28 = vector.load %arg9[%c0_19, %c0_20] : memref<16x16xf32, #tpu.memory_space<vmem>>, vector<16x16xf32>
    %cst_21 = arith.constant dense<0.000000e+00> : vector<32x16xf32>
    %29 = tpu.matmul %27, %28, %cst_21 {dimension_numbers = #tpu.dot_dimension_numbers<[1], [0], [0], [1], [0, 0, 1, 1], [], []>} : vector<32x16xf32>, vector<16x16xf32>, vector<32x16xf32> -> vector<32x16xf32>
    %c0_22 = arith.constant 0 : index
    %c0_23 = arith.constant 0 : index
    %30 = vector.load %arg10[%c0_22, %c0_23] : memref<1x16xf32, #tpu.memory_space<vmem>>, vector<1x16xf32>
    %31 = vector.broadcast %30 : vector<1x16xf32> to vector<32x16xf32>
    %32 = arith.addf %29, %31 : vector<32x16xf32>
    %c0_24 = arith.constant 0 : index
    %c0_25 = arith.constant 0 : index
    %c0_26 = arith.constant 0 : index
    %33 = vector.load %arg6[%c0_24, %c0_25, %c0_26] : memref<1x32x1xf32, #tpu.memory_space<vmem>>, vector<1x32x1xf32>
    %34 = vector.shape_cast %33 : vector<1x32x1xf32> to vector<32x1xf32>
    %35 = vector.broadcast %34 : vector<32x1xf32> to vector<32x16xf32>
    %36 = arith.mulf %35, %32 : vector<32x16xf32>
    %37 = tpu.concatenate %25, %36 in 1 : vector<32x32xf32>, vector<32x16xf32> -> vector<32x48xf32>
    %cst_27 = arith.constant dense<0.000000e+00> : vector<16x48xf32>
    %38 = tpu.matmul %19, %37, %cst_27 {dimension_numbers = #tpu.dot_dimension_numbers<[0], [0], [1], [1], [0, 1, 1, 1], [], []>} : vector<32x16xf32>, vector<32x48xf32>, vector<16x48xf32> -> vector<16x48xf32>
    %c0_28 = arith.constant 0 : index
    %c0_29 = arith.constant 0 : index
    %39 = vector.load %arg11[%c0_28, %c0_29] : memref<32x128xf32, #tpu.memory_space<vmem>>, vector<32x128xf32>
    %cst_30 = arith.constant dense<0.000000e+00> : vector<16x128xf32>
    %40 = tpu.matmul %6, %39, %cst_30 {dimension_numbers = #tpu.dot_dimension_numbers<[1], [0], [0], [1], [0, 0, 1, 1], [], []>} : vector<16x32xf32>, vector<32x128xf32>, vector<16x128xf32> -> vector<16x128xf32>
    %c0_31 = arith.constant 0 : index
    %c0_32 = arith.constant 0 : index
    %41 = vector.load %arg12[%c0_31, %c0_32] : memref<48x128xf32, #tpu.memory_space<vmem>>, vector<48x128xf32>
    %cst_33 = arith.constant dense<0.000000e+00> : vector<16x128xf32>
    %42 = tpu.matmul %38, %41, %cst_33 {dimension_numbers = #tpu.dot_dimension_numbers<[1], [0], [0], [1], [0, 0, 1, 1], [], []>} : vector<16x48xf32>, vector<48x128xf32>, vector<16x128xf32> -> vector<16x128xf32>
    %43 = arith.addf %40, %42 : vector<16x128xf32>
    %c0_34 = arith.constant 0 : index
    %c0_35 = arith.constant 0 : index
    %44 = vector.load %arg13[%c0_34, %c0_35] : memref<1x128xf32, #tpu.memory_space<vmem>>, vector<1x128xf32>
    %45 = vector.broadcast %44 : vector<1x128xf32> to vector<16x128xf32>
    %46 = arith.addf %43, %45 : vector<16x128xf32>
    %cst_36 = arith.constant 0.000000e+00 : f32
    %47 = vector.broadcast %cst_36 : f32 to vector<16x128xf32>
    %48 = arith.maximumf %46, %47 : vector<16x128xf32>
    %c0_37 = arith.constant 0 : index
    %c0_38 = arith.constant 0 : index
    %c0_39 = arith.constant 0 : index
    %49 = vector.load %arg14[%c0_37, %c0_38, %c0_39] : memref<1x16x128xf32, #tpu.memory_space<vmem>>, vector<1x16x128xf32>
    %50 = vector.shape_cast %49 : vector<1x16x128xf32> to vector<16x128xf32>
    %51 = vector.shape_cast %48 : vector<16x128xf32> to vector<1x16x128xf32>
    tpu.vector_store %arg14[%c0_37, %c0_38, %c0_39], %51 {strides = array<i32>} : memref<1x16x128xf32, #tpu.memory_space<vmem>>, vector<1x16x128xf32>,
    return
  }
  func.func @transform_0(%arg0: i32) -> (i32, i32, i32) {
    %c0_i32 = arith.constant 0 : i32
    %c0_i32_0 = arith.constant 0 : i32
    %c0_i32_1 = arith.constant 0 : i32
    return %arg0, %c0_i32, %c0_i32_0 : i32, i32, i32
  }
  func.func @transform_1(%arg0: i32) -> (i32, i32, i32) {
    %c0_i32 = arith.constant 0 : i32
    %c0_i32_0 = arith.constant 0 : i32
    %c0_i32_1 = arith.constant 0 : i32
    return %arg0, %c0_i32, %c0_i32_0 : i32, i32, i32
  }
  func.func @transform_2(%arg0: i32) -> (i32, i32, i32) {
    %c0_i32 = arith.constant 0 : i32
    %c0_i32_0 = arith.constant 0 : i32
    %c0_i32_1 = arith.constant 0 : i32
    return %arg0, %c0_i32, %c0_i32_0 : i32, i32, i32
  }
  func.func @transform_3(%arg0: i32) -> (i32, i32, i32) {
    %c0_i32 = arith.constant 0 : i32
    %c0_i32_0 = arith.constant 0 : i32
    %c0_i32_1 = arith.constant 0 : i32
    return %arg0, %c0_i32, %c0_i32_0 : i32, i32, i32
  }
  func.func @transform_4(%arg0: i32) -> (i32, i32, i32) {
    %c0_i32 = arith.constant 0 : i32
    %c0_i32_0 = arith.constant 0 : i32
    %c0_i32_1 = arith.constant 0 : i32
    return %arg0, %c0_i32, %c0_i32_0 : i32, i32, i32
  }
  func.func @transform_5(%arg0: i32) -> (i32, i32, i32) {
    %c0_i32 = arith.constant 0 : i32
    %c0_i32_0 = arith.constant 0 : i32
    %c0_i32_1 = arith.constant 0 : i32
    return %arg0, %c0_i32, %c0_i32_0 : i32, i32, i32
  }
  func.func @transform_6(%arg0: i32) -> (i32, i32) {
    %c0_i32 = arith.constant 0 : i32
    %c0_i32_0 = arith.constant 0 : i32
    %c0_i32_1 = arith.constant 0 : i32
    return %c0_i32, %c0_i32_0 : i32, i32
  }
  func.func @transform_7(%arg0: i32) -> (i32, i32) {
    %c0_i32 = arith.constant 0 : i32
    %c0_i32_0 = arith.constant 0 : i32
    %c0_i32_1 = arith.constant 0 : i32
    return %c0_i32, %c0_i32_0 : i32, i32
  }
  func.func @transform_8(%arg0: i32) -> (i32, i32) {
    %c0_i32 = arith.constant 0 : i32
    %c0_i32_0 = arith.constant 0 : i32
    %c0_i32_1 = arith.constant 0 : i32
    return %c0_i32, %c0_i32_0 : i32, i32
  }
  func.func @transform_9(%arg0: i32) -> (i32, i32) {
    %c0_i32 = arith.constant 0 : i32
    %c0_i32_0 = arith.constant 0 : i32
    %c0_i32_1 = arith.constant 0 : i32
    return %c0_i32, %c0_i32_0 : i32, i32
  }
  func.func @transform_10(%arg0: i32) -> (i32, i32) {
    %c0_i32 = arith.constant 0 : i32
    %c0_i32_0 = arith.constant 0 : i32
    %c0_i32_1 = arith.constant 0 : i32
    return %c0_i32, %c0_i32_0 : i32, i32
  }
  func.func @transform_11(%arg0: i32) -> (i32, i32) {
    %c0_i32 = arith.constant 0 : i32
    %c0_i32_0 = arith.constant 0 : i32
    %c0_i32_1 = arith.constant 0 : i32
    return %c0_i32, %c0_i32_0 : i32, i32
  }
  func.func @transform_12(%arg0: i32) -> (i32, i32) {
    %c0_i32 = arith.constant 0 : i32
    %c0_i32_0 = arith.constant 0 : i32
    %c0_i32_1 = arith.constant 0 : i32
    return %c0_i32, %c0_i32_0 : i32, i32
  }
  func.func @transform_13(%arg0: i32) -> (i32, i32, i32) {
    %c0_i32 = arith.constant 0 : i32
    %c0_i32_0 = arith.constant 0 : i32
    %c0_i32_1 = arith.constant 0 : i32
    return %arg0, %c0_i32, %c0_i32_0 : i32, i32, i32
  }
}

</mosaic_0001>

<llo_original>
// kernel: tpu_custom_call.1
$region0: #{tpu_custom_call.1}
  #allocation0 [shape = 'u32[]', space=smem, size = 0x4, offset = 0x4, fixed_abs, tag = 'smem constant byte address 0x4 - core index']
  #allocation1 [shape = 'u32[144,128]{1,0:T(1,128)}', space=vmem, size = 0x12000, scoped, tag = 'internal scratch']
  %s0 = inlined_call_operand.vmem [shape: f32[4,16,32], index: 0, kind: input, shape index: {}]
  %s1 = inlined_call_operand.vmem [shape: f32[4,16,1], index: 1, kind: input, shape index: {}]
  %s2 = inlined_call_operand.vmem [shape: s32[4,32,1], index: 2, kind: input, shape index: {}]
  %s3 = inlined_call_operand.vmem [shape: s32[4,32,1], index: 3, kind: input, shape index: {}]
  %s4 = inlined_call_operand.vmem [shape: f32[4,32,16], index: 4, kind: input, shape index: {}]
  %s5 = inlined_call_operand.vmem [shape: f32[4,32,1], index: 5, kind: input, shape index: {}]
  %s6 = inlined_call_operand.vmem [shape: f32[32,32], index: 6, kind: input, shape index: {}]
  %s7 = inlined_call_operand.vmem [shape: f32[1,32], index: 7, kind: input, shape index: {}]
  %s8 = inlined_call_operand.vmem [shape: f32[16,16], index: 8, kind: input, shape index: {}]
  %s9 = inlined_call_operand.vmem [shape: f32[1,16], index: 9, kind: input, shape index: {}]
  %s10 = inlined_call_operand.vmem [shape: f32[32,128], index: 10, kind: input, shape index: {}]
  %s11 = inlined_call_operand.vmem [shape: f32[48,128], index: 11, kind: input, shape index: {}]
  %s12 = inlined_call_operand.vmem [shape: f32[1,128], index: 12, kind: input, shape index: {}]
  %s13 = inlined_call_operand.hbm [shape: f32[4,16,128], index: 13, kind: output, shape index: {}]
  %s14 = sld [smem:[#allocation0]]
  $region85: #{tpu_custom_call.1} parent=0
    _
  %s16 = ssub.s32 1, %s14
  %s17 = scalar_select 0, %s16, %s14
  $region1: #{tpu_custom_call.1} parent=0
    #allocation2 [shape = 'u8[16384]{0}', space=vmem, size = 0x4000, scoped, tag = 'output window, operand 0']
    #allocation3 [shape = 's32[2]{0}', space=sflag, size = 0x8, scoped, tag = 'scoped memory for tpu_custom_call.1']
    %18 = vsyncpa [#allocation3], 0
    %s19 = scalar_lea.sflag [#allocation3], 1
    %20 = vsyncpa %s19, 0
    loop: start=0, step=1, limit=6
    $region2: #{tpu_custom_call.1} parent=1 // loop_pre_header
      _
    $region3: #{tpu_custom_call.1} parent=1 // loop_header
      %s22 = sphi 0, %s26
      %p23 = scmp.ge.s32.totalorder %s22, 6
      %s32 = sphi 0, %s34
      %s35 = sphi 0, %s32
      %s36 = sphi 0, %s35
      %s52 = sphi 0, %s36
      %s58 = sphi 0, %s60
      %s61 = sphi 0, %s58
      %s62 = sphi 0, %s61
      %s78 = sphi 0, %s62
      %s84 = sphi 0, %s86
      %s87 = sphi 0, %s84
      %s88 = sphi 0, %s87
      %s104 = sphi 0, %s88
      %s110 = sphi 0, %s112
      %s113 = sphi 0, %s110
      %s114 = sphi 0, %s113
      %s130 = sphi 0, %s114
      %s136 = sphi 0, %s138
      %s139 = sphi 0, %s136
      %s140 = sphi 0, %s139
      %s156 = sphi 0, %s140
      %s162 = sphi 0, %s164
      %s165 = sphi 0, %s162
      %s166 = sphi 0, %s165
      %s182 = sphi 0, %s166
      %s186 = sphi 0, %s186
      %s188 = sphi 0, %s186
      %s189 = sphi 0, %s188
      %s203 = sphi 0, %s189
      %s207 = sphi 0, %s207
      %s209 = sphi 0, %s207
      %s210 = sphi 0, %s209
      %s224 = sphi 0, %s210
      %s228 = sphi 0, %s228
      %s230 = sphi 0, %s228
      %s231 = sphi 0, %s230
      %s245 = sphi 0, %s231
      %s249 = sphi 0, %s249
      %s251 = sphi 0, %s249
      %s252 = sphi 0, %s251
      %s266 = sphi 0, %s252
      %s270 = sphi 0, %s270
      %s272 = sphi 0, %s270
      %s273 = sphi 0, %s272
      %s287 = sphi 0, %s273
      %s291 = sphi 0, %s291
      %s293 = sphi 0, %s291
      %s294 = sphi 0, %s293
      %s308 = sphi 0, %s294
      %s312 = sphi 0, %s312
      %s314 = sphi 0, %s312
      %s315 = sphi 0, %s314
      %s329 = sphi 0, %s315
      %s335 = sphi 0, %s337
      %s338 = sphi 0, %s335
      %s339 = sphi 0, %s338
      %s355 = sphi 0, %s339
    $region4: #{tpu_custom_call.1} parent=1 // loop_header_branch
      %25 = sbr.rel (%p23) target = $region8
    $region5: #{tpu_custom_call.1} parent=1 // loop_body
      %s27 = ssub.s32 %s22, 1
      %s28 = ssub.s32 %s22, 2
      %s29 = sadd.s32 %s22, 1
      %s30 = ssub.s32 %s22, %s29
      %p31 = scmp.eq.s32.totalorder %s30, 0
      %s33 = sadd.s32 %s32, 1
      %s34 = scalar_select %p31, %s32, %s33
      %p37 = pneg %p31
      %p38 = scmp.eq.s32.totalorder %s22, 3
      %p39 = por %p37, %p38
      %p40 = scmp.ne.s32.totalorder %s32, %s35
      %p41 = scmp.eq.s32.totalorder %s22, 0
      %p42 = por %p40, %p41
      %p43 = scmp.ne.s32.totalorder %s32, %s35
      %p44 = scmp.eq.s32.totalorder %s27, 3
      %p45 = por %p43, %p44
      %p46 = scmp.ne.s32.totalorder %s35, %s36
      %p47 = scmp.eq.s32.totalorder %s27, 0
      %p48 = por %p46, %p47
      %p49 = scmp.ne.s32.totalorder %s35, %s36
      %p50 = scmp.eq.s32.totalorder %s28, 3
      %p51 = por %p49, %p50
      %p53 = scmp.ne.s32.totalorder %s36, %s52
      %p54 = scmp.eq.s32.totalorder %s28, 0
      %p55 = por %p53, %p54
      %s56 = ssub.s32 %s22, %s29
      %p57 = scmp.eq.s32.totalorder %s56, 0
      %s59 = sadd.s32 %s58, 1
      %s60 = scalar_select %p57, %s58, %s59
      %p63 = pneg %p57
      %p64 = scmp.eq.s32.totalorder %s22, 3
      %p65 = por %p63, %p64
      %p66 = scmp.ne.s32.totalorder %s58, %s61
      %p67 = scmp.eq.s32.totalorder %s22, 0
      %p68 = por %p66, %p67
      %p69 = scmp.ne.s32.totalorder %s58, %s61
      %p70 = scmp.eq.s32.totalorder %s27, 3
      %p71 = por %p69, %p70
      %p72 = scmp.ne.s32.totalorder %s61, %s62
      %p73 = scmp.eq.s32.totalorder %s27, 0
      %p74 = por %p72, %p73
      %p75 = scmp.ne.s32.totalorder %s61, %s62
      %p76 = scmp.eq.s32.totalorder %s28, 3
      %p77 = por %p75, %p76
      %p79 = scmp.ne.s32.totalorder %s62, %s78
      %p80 = scmp.eq.s32.totalorder %s28, 0
      %p81 = por %p79, %p80
      %s82 = ssub.s32 %s22, %s29
      %p83 = scmp.eq.s32.totalorder %s82, 0
      %s85 = sadd.s32 %s84, 1
      %s86 = scalar_select %p83, %s84, %s85
      %p89 = pneg %p83
      %p90 = scmp.eq.s32.totalorder %s22, 3
      %p91 = por %p89, %p90
      %p92 = scmp.ne.s32.totalorder %s84, %s87
      %p93 = scmp.eq.s32.totalorder %s22, 0
      %p94 = por %p92, %p93
      %p95 = scmp.ne.s32.totalorder %s84, %s87
      %p96 = scmp.eq.s32.totalorder %s27, 3
      %p97 = por %p95, %p96
      %p98 = scmp.ne.s32.totalorder %s87, %s88
      %p99 = scmp.eq.s32.totalorder %s27, 0
      %p100 = por %p98, %p99
      %p101 = scmp.ne.s32.totalorder %s87, %s88
      %p102 = scmp.eq.s32.totalorder %s28, 3
      %p103 = por %p101, %p102
      %p105 = scmp.ne.s32.totalorder %s88, %s104
      %p106 = scmp.eq.s32.totalorder %s28, 0
      %p107 = por %p105, %p106
      %s108 = ssub.s32 %s22, %s29
      %p109 = scmp.eq.s32.totalorder %s108, 0
      %s111 = sadd.s32 %s110, 1
      %s112 = scalar_select %p109, %s110, %s111
      %p115 = pneg %p109
      %p116 = scmp.eq.s32.totalorder %s22, 3
      %p117 = por %p115, %p116
      %p118 = scmp.ne.s32.totalorder %s110, %s113
      %p119 = scmp.eq.s32.totalorder %s22, 0
      %p120 = por %p118, %p119
      %p121 = scmp.ne.s32.totalorder %s110, %s113
      %p122 = scmp.eq.s32.totalorder %s27, 3
      %p123 = por %p121, %p122
      %p124 = scmp.ne.s32.totalorder %s113, %s114
      %p125 = scmp.eq.s32.totalorder %s27, 0
      %p126 = por %p124, %p125
      %p127 = scmp.ne.s32.totalorder %s113, %s114
      %p128 = scmp.eq.s32.totalorder %s28, 3
      %p129 = por %p127, %p128
      %p131 = scmp.ne.s32.totalorder %s114, %s130
      %p132 = scmp.eq.s32.totalorder %s28, 0
      %p133 = por %p131, %p132
      %s134 = ssub.s32 %s22, %s29
      %p135 = scmp.eq.s32.totalorder %s134, 0
      %s137 = sadd.s32 %s136, 1
      %s138 = scalar_select %p135, %s136, %s137
      %p141 = pneg %p135
      %p142 = scmp.eq.s32.totalorder %s22, 3
      %p143 = por %p141, %p142
      %p144 = scmp.ne.s32.totalorder %s136, %s139
      %p145 = scmp.eq.s32.totalorder %s22, 0
      %p146 = por %p144, %p145
      %p147 = scmp.ne.s32.totalorder %s136, %s139
      %p148 = scmp.eq.s32.totalorder %s27, 3
      %p149 = por %p147, %p148
      %p150 = scmp.ne.s32.totalorder %s139, %s140
      %p151 = scmp.eq.s32.totalorder %s27, 0
      %p152 = por %p150, %p151
      %p153 = scmp.ne.s32.totalorder %s139, %s140
      %p154 = scmp.eq.s32.totalorder %s28, 3
      %p155 = por %p153, %p154
      %p157 = scmp.ne.s32.totalorder %s140, %s156
      %p158 = scmp.eq.s32.totalorder %s28, 0
      %p159 = por %p157, %p158
      %s160 = ssub.s32 %s22, %s29
      %p161 = scmp.eq.s32.totalorder %s160, 0
      %s163 = sadd.s32 %s162, 1
      %s164 = scalar_select %p161, %s162, %s163
      %p167 = pneg %p161
      %p168 = scmp.eq.s32.totalorder %s22, 3
      %p169 = por %p167, %p168
      %p170 = scmp.ne.s32.totalorder %s162, %s165
      %p171 = scmp.eq.s32.totalorder %s22, 0
      %p172 = por %p170, %p171
      %p173 = scmp.ne.s32.totalorder %s162, %s165
      %p174 = scmp.eq.s32.totalorder %s27, 3
      %p175 = por %p173, %p174
      %p176 = scmp.ne.s32.totalorder %s165, %s166
      %p177 = scmp.eq.s32.totalorder %s27, 0
      %p178 = por %p176, %p177
      %p179 = scmp.ne.s32.totalorder %s165, %s166
      %p180 = scmp.eq.s32.totalorder %s28, 3
      %p181 = por %p179, %p180
      %p183 = scmp.ne.s32.totalorder %s166, %s182
      %p184 = scmp.eq.s32.totalorder %s28, 0
      %p185 = por %p183, %p184
      %s187 = sadd.s32 %s186, 1
      %p190 = scmp.eq.s32.totalorder %s22, 3
      %p191 = scmp.ne.s32.totalorder %s186, %s188
      %p192 = scmp.eq.s32.totalorder %s22, 0
      %p193 = por %p191, %p192
      %p194 = scmp.ne.s32.totalorder %s186, %s188
      %p195 = scmp.eq.s32.totalorder %s27, 3
      %p196 = por %p194, %p195
      %p197 = scmp.ne.s32.totalorder %s188, %s189
      %p198 = scmp.eq.s32.totalorder %s27, 0
      %p199 = por %p197, %p198
      %p200 = scmp.ne.s32.totalorder %s188, %s189
      %p201 = scmp.eq.s32.totalorder %s28, 3
      %p202 = por %p200, %p201
      %p204 = scmp.ne.s32.totalorder %s189, %s203
      %p205 = scmp.eq.s32.totalorder %s28, 0
      %p206 = por %p204, %p205
      %s208 = sadd.s32 %s207, 1
      %p211 = scmp.eq.s32.totalorder %s22, 3
      %p212 = scmp.ne.s32.totalorder %s207, %s209
      %p213 = scmp.eq.s32.totalorder %s22, 0
      %p214 = por %p212, %p213
      %p215 = scmp.ne.s32.totalorder %s207, %s209
      %p216 = scmp.eq.s32.totalorder %s27, 3
      %p217 = por %p215, %p216
      %p218 = scmp.ne.s32.totalorder %s209, %s210
      %p219 = scmp.eq.s32.totalorder %s27, 0
      %p220 = por %p218, %p219
      %p221 = scmp.ne.s32.totalorder %s209, %s210
      %p222 = scmp.eq.s32.totalorder %s28, 3
      %p223 = por %p221, %p222
      %p225 = scmp.ne.s32.totalorder %s210, %s224
      %p226 = scmp.eq.s32.totalorder %s28, 0
      %p227 = por %p225, %p226
      %s229 = sadd.s32 %s228, 1
      %p232 = scmp.eq.s32.totalorder %s22, 3
      %p233 = scmp.ne.s32.totalorder %s228, %s230
      %p234 = scmp.eq.s32.totalorder %s22, 0
      %p235 = por %p233, %p234
      %p236 = scmp.ne.s32.totalorder %s228, %s230
      %p237 = scmp.eq.s32.totalorder %s27, 3
      %p238 = por %p236, %p237
      %p239 = scmp.ne.s32.totalorder %s230, %s231
      %p240 = scmp.eq.s32.totalorder %s27, 0
      %p241 = por %p239, %p240
      %p242 = scmp.ne.s32.totalorder %s230, %s231
      %p243 = scmp.eq.s32.totalorder %s28, 3
      %p244 = por %p242, %p243
      %p246 = scmp.ne.s32.totalorder %s231, %s245
      %p247 = scmp.eq.s32.totalorder %s28, 0
      %p248 = por %p246, %p247
      %s250 = sadd.s32 %s249, 1
      %p253 = scmp.eq.s32.totalorder %s22, 3
      %p254 = scmp.ne.s32.totalorder %s249, %s251
      %p255 = scmp.eq.s32.totalorder %s22, 0
      %p256 = por %p254, %p255
      %p257 = scmp.ne.s32.totalorder %s249, %s251
      %p258 = scmp.eq.s32.totalorder %s27, 3
      %p259 = por %p257, %p258
      %p260 = scmp.ne.s32.totalorder %s251, %s252
      %p261 = scmp.eq.s32.totalorder %s27, 0
      %p262 = por %p260, %p261
      %p263 = scmp.ne.s32.totalorder %s251, %s252
      %p264 = scmp.eq.s32.totalorder %s28, 3
      %p265 = por %p263, %p264
      %p267 = scmp.ne.s32.totalorder %s252, %s266
      %p268 = scmp.eq.s32.totalorder %s28, 0
      %p269 = por %p267, %p268
      %s271 = sadd.s32 %s270, 1
      %p274 = scmp.eq.s32.totalorder %s22, 3
      %p275 = scmp.ne.s32.totalorder %s270, %s272
      %p276 = scmp.eq.s32.totalorder %s22, 0
      %p277 = por %p275, %p276
      %p278 = scmp.ne.s32.totalorder %s270, %s272
      %p279 = scmp.eq.s32.totalorder %s27, 3
      %p280 = por %p278, %p279
      %p281 = scmp.ne.s32.totalorder %s272, %s273
      %p282 = scmp.eq.s32.totalorder %s27, 0
      %p283 = por %p281, %p282
      %p284 = scmp.ne.s32.totalorder %s272, %s273
      %p285 = scmp.eq.s32.totalorder %s28, 3
      %p286 = por %p284, %p285
      %p288 = scmp.ne.s32.totalorder %s273, %s287
      %p289 = scmp.eq.s32.totalorder %s28, 0
      %p290 = por %p288, %p289
      %s292 = sadd.s32 %s291, 1
      %p295 = scmp.eq.s32.totalorder %s22, 3
      %p296 = scmp.ne.s32.totalorder %s291, %s293
      %p297 = scmp.eq.s32.totalorder %s22, 0
      %p298 = por %p296, %p297
      %p299 = scmp.ne.s32.totalorder %s291, %s293
      %p300 = scmp.eq.s32.totalorder %s27, 3
      %p301 = por %p299, %p300
      %p302 = scmp.ne.s32.totalorder %s293, %s294
      %p303 = scmp.eq.s32.totalorder %s27, 0
      %p304 = por %p302, %p303
      %p305 = scmp.ne.s32.totalorder %s293, %s294
      %p306 = scmp.eq.s32.totalorder %s28, 3
      %p307 = por %p305, %p306
      %p309 = scmp.ne.s32.totalorder %s294, %s308
      %p310 = scmp.eq.s32.totalorder %s28, 0
      %p311 = por %p309, %p310
      %s313 = sadd.s32 %s312, 1
      %p316 = scmp.eq.s32.totalorder %s22, 3
      %p317 = scmp.ne.s32.totalorder %s312, %s314
      %p318 = scmp.eq.s32.totalorder %s22, 0
      %p319 = por %p317, %p318
      %p320 = scmp.ne.s32.totalorder %s312, %s314
      %p321 = scmp.eq.s32.totalorder %s27, 3
      %p322 = por %p320, %p321
      %p323 = scmp.ne.s32.totalorder %s314, %s315
      %p324 = scmp.eq.s32.totalorder %s27, 0
      %p325 = por %p323, %p324
      %p326 = scmp.ne.s32.totalorder %s314, %s315
      %p327 = scmp.eq.s32.totalorder %s28, 3
      %p328 = por %p326, %p327
      %p330 = scmp.ne.s32.totalorder %s315, %s329
      %p331 = scmp.eq.s32.totalorder %s28, 0
      %p332 = por %p330, %p331
      %s333 = ssub.s32 %s22, %s29
      %p334 = scmp.eq.s32.totalorder %s333, 0
      %s336 = sadd.s32 %s335, 1
      %s337 = scalar_select %p334, %s335, %s336
      %p340 = pneg %p334
      %p341 = scmp.eq.s32.totalorder %s22, 3
      %p342 = por %p340, %p341
      %p343 = scmp.ne.s32.totalorder %s335, %s338
      %p344 = scmp.eq.s32.totalorder %s22, 0
      %p345 = por %p343, %p344
      %p346 = scmp.ne.s32.totalorder %s335, %s338
      %p347 = scmp.eq.s32.totalorder %s27, 3
      %p348 = por %p346, %p347
      %p349 = scmp.ne.s32.totalorder %s338, %s339
      %p350 = scmp.eq.s32.totalorder %s27, 0
      %p351 = por %p349, %p350
      %p352 = scmp.ne.s32.totalorder %s338, %s339
      %p353 = scmp.eq.s32.totalorder %s28, 3
      %p354 = por %p352, %p353
      %p356 = scmp.ne.s32.totalorder %s339, %s355
      %p357 = scmp.eq.s32.totalorder %s28, 0
      %p358 = por %p356, %p357
      %p359 = scmp.le.s32.totalorder 1, %s22
      %p360 = scmp.lt.s32.totalorder %s22, 5
      %p361 = pnand %p359, %p360
      %p362 = pneg %p361
      // Predicated region
      $region9: #{tpu_custom_call.1} parent=5 // pred_check
        _
      $region10: #{tpu_custom_call.1} parent=5 // pred_check_branch
        %364 = sbr.rel (%p361) target = $region12
      $region11: #{tpu_custom_call.1} parent=5 // pred_region
        %s365 = ssub.s32 %s22, 1
        // Predicated region
        $region13: #{tpu_custom_call.1} parent=11 // pred_check
          %p366 = pneg %p199
        $region14: #{tpu_custom_call.1} parent=11 // pred_check_branch
          %368 = sbr.rel (%p366) target = $region16
        $region15: #{tpu_custom_call.1} parent=11 // pred_region
          _
        $region16: #{tpu_custom_call.1} parent=11 // pred_fallthru
          _
        // Predicated region
        $region17: #{tpu_custom_call.1} parent=11 // pred_check
          %p369 = pneg %p220
        $region18: #{tpu_custom_call.1} parent=11 // pred_check_branch
          %371 = sbr.rel (%p369) target = $region20
        $region19: #{tpu_custom_call.1} parent=11 // pred_region
          _
        $region20: #{tpu_custom_call.1} parent=11 // pred_fallthru
          _
        // Predicated region
        $region21: #{tpu_custom_call.1} parent=11 // pred_check
          %p372 = pneg %p241
        $region22: #{tpu_custom_call.1} parent=11 // pred_check_branch
          %374 = sbr.rel (%p372) target = $region24
        $region23: #{tpu_custom_call.1} parent=11 // pred_region
          _
        $region24: #{tpu_custom_call.1} parent=11 // pred_fallthru
          _
        // Predicated region
        $region25: #{tpu_custom_call.1} parent=11 // pred_check
          %p375 = pneg %p262
        $region26: #{tpu_custom_call.1} parent=11 // pred_check_branch
          %377 = sbr.rel (%p375) target = $region28
        $region27: #{tpu_custom_call.1} parent=11 // pred_region
          _
        $region28: #{tpu_custom_call.1} parent=11 // pred_fallthru
          _
        // Predicated region
        $region29: #{tpu_custom_call.1} parent=11 // pred_check
          %p378 = pneg %p283
        $region30: #{tpu_custom_call.1} parent=11 // pred_check_branch
          %380 = sbr.rel (%p378) target = $region32
        $region31: #{tpu_custom_call.1} parent=11 // pred_region
          _
        $region32: #{tpu_custom_call.1} parent=11 // pred_fallthru
          _
        // Predicated region
        $region33: #{tpu_custom_call.1} parent=11 // pred_check
          %p381 = pneg %p304
        $region34: #{tpu_custom_call.1} parent=11 // pred_check_branch
          %383 = sbr.rel (%p381) target = $region36
        $region35: #{tpu_custom_call.1} parent=11 // pred_region
          _
        $region36: #{tpu_custom_call.1} parent=11 // pred_fallthru
          _
        // Predicated region
        $region37: #{tpu_custom_call.1} parent=11 // pred_check
          %p384 = pneg %p325
        $region38: #{tpu_custom_call.1} parent=11 // pred_check_branch
          %386 = sbr.rel (%p384) target = $region40
        $region39: #{tpu_custom_call.1} parent=11 // pred_region
          _
        $region40: #{tpu_custom_call.1} parent=11 // pred_fallthru
          _
      $region12: #{tpu_custom_call.1} parent=5 // pred_fallthru
        _
      %p387 = scmp.lt.s32.totalorder %s22, 4
      // Predicated region
      $region41: #{tpu_custom_call.1} parent=5 // pred_check
        %p388 = pneg %p387
      $region42: #{tpu_custom_call.1} parent=5 // pred_check_branch
        %390 = sbr.rel (%p388) target = $region44
      $region43: #{tpu_custom_call.1} parent=5 // pred_region
        // Predicated region
        $region45: #{tpu_custom_call.1} parent=43 // pred_check
          %p391 = pneg %p42
        $region46: #{tpu_custom_call.1} parent=43 // pred_check_branch
          %393 = sbr.rel (%p391) target = $region48
        $region47: #{tpu_custom_call.1} parent=43 // pred_region
          %p394 = scmp.lt.s32.totalorder %s22, 3
          %s395 = scalar_select %p394, %s22, 3
          %s396 = smul.addr %s395, 2
          %s397 = smul.addr %s396, 8
          %s398 = scalar_lea.vmem %s0, %s397
        $region48: #{tpu_custom_call.1} parent=43 // pred_fallthru
          _
        // Predicated region
        $region49: #{tpu_custom_call.1} parent=43 // pred_check
          %p399 = pneg %p68
        $region50: #{tpu_custom_call.1} parent=43 // pred_check_branch
          %401 = sbr.rel (%p399) target = $region52
        $region51: #{tpu_custom_call.1} parent=43 // pred_region
          %p402 = scmp.lt.s32.totalorder %s22, 3
          %s403 = scalar_select %p402, %s22, 3
          %s404 = smul.addr %s403, 2
          %s405 = smul.addr %s404, 8
          %s406 = scalar_lea.vmem %s1, %s405
        $region52: #{tpu_custom_call.1} parent=43 // pred_fallthru
          _
        // Predicated region
        $region53: #{tpu_custom_call.1} parent=43 // pred_check
          %p407 = pneg %p94
        $region54: #{tpu_custom_call.1} parent=43 // pred_check_branch
          %409 = sbr.rel (%p407) target = $region56
        $region55: #{tpu_custom_call.1} parent=43 // pred_region
          %p410 = scmp.lt.s32.totalorder %s22, 3
          %s411 = scalar_select %p410, %s22, 3
          %s412 = smul.addr %s411, 4
          %s413 = smul.addr %s412, 8
          %s414 = scalar_lea.vmem %s2, %s413
        $region56: #{tpu_custom_call.1} parent=43 // pred_fallthru
          _
        // Predicated region
        $region57: #{tpu_custom_call.1} parent=43 // pred_check
          %p415 = pneg %p120
        $region58: #{tpu_custom_call.1} parent=43 // pred_check_branch
          %417 = sbr.rel (%p415) target = $region60
        $region59: #{tpu_custom_call.1} parent=43 // pred_region
          %p418 = scmp.lt.s32.totalorder %s22, 3
          %s419 = scalar_select %p418, %s22, 3
          %s420 = smul.addr %s419, 4
          %s421 = smul.addr %s420, 8
          %s422 = scalar_lea.vmem %s3, %s421
        $region60: #{tpu_custom_call.1} parent=43 // pred_fallthru
          _
        // Predicated region
        $region61: #{tpu_custom_call.1} parent=43 // pred_check
          %p423 = pneg %p146
        $region62: #{tpu_custom_call.1} parent=43 // pred_check_branch
          %425 = sbr.rel (%p423) target = $region64
        $region63: #{tpu_custom_call.1} parent=43 // pred_region
          %p426 = scmp.lt.s32.totalorder %s22, 3
          %s427 = scalar_select %p426, %s22, 3
          %s428 = smul.addr %s427, 4
          %s429 = smul.addr %s428, 8
          %s430 = scalar_lea.vmem %s4, %s429
        $region64: #{tpu_custom_call.1} parent=43 // pred_fallthru
          _
        // Predicated region
        $region65: #{tpu_custom_call.1} parent=43 // pred_check
          %p431 = pneg %p172
        $region66: #{tpu_custom_call.1} parent=43 // pred_check_branch
          %433 = sbr.rel (%p431) target = $region68
        $region67: #{tpu_custom_call.1} parent=43 // pred_region
          %p434 = scmp.lt.s32.totalorder %s22, 3
          %s435 = scalar_select %p434, %s22, 3
          %s436 = smul.addr %s435, 4
          %s437 = smul.addr %s436, 8
          %s438 = scalar_lea.vmem %s5, %s437
        $region68: #{tpu_custom_call.1} parent=43 // pred_fallthru
          _
      $region44: #{tpu_custom_call.1} parent=5 // pred_fallthru
        _
      %p439 = scmp.le.s32.totalorder 1, %s22
      %p440 = scmp.lt.s32.totalorder %s22, 5
      %p441 = pnand %p439, %p440
      %p442 = pneg %p441
      // Predicated region
      $region69: #{tpu_custom_call.1} parent=5 // pred_check
        _
      $region70: #{tpu_custom_call.1} parent=5 // pred_check_branch
        %444 = sbr.rel (%p441) target = $region72
      $region71: #{tpu_custom_call.1} parent=5 // pred_region
        %s445 = ssub.s32 %s22, 1
        %p446 = scmp.lt.s32.totalorder %s27, 3
        %s447 = scalar_select %p446, %s27, 3
        %s448 = smul.addr %s447, 2
        %s449 = smul.addr %s448, 8
        %s450 = scalar_lea.vmem %s0, %s449
        %p451 = pneg %p48
        %p452 = pneg %p45
        %p453 = scmp.lt.s32.totalorder %s27, 3
        %s454 = scalar_select %p453, %s27, 3
        %s455 = smul.addr %s454, 2
        %s456 = smul.addr %s455, 8
        %s457 = scalar_lea.vmem %s1, %s456
        %p458 = pneg %p74
        %p459 = pneg %p71
        %p460 = scmp.lt.s32.totalorder %s27, 3
        %s461 = scalar_select %p460, %s27, 3
        %s462 = smul.addr %s461, 4
        %s463 = smul.addr %s462, 8
        %s464 = scalar_lea.vmem %s2, %s463
        %p465 = pneg %p100
        %p466 = pneg %p97
        %p467 = scmp.lt.s32.totalorder %s27, 3
        %s468 = scalar_select %p467, %s27, 3
        %s469 = smul.addr %s468, 4
        %s470 = smul.addr %s469, 8
        %s471 = scalar_lea.vmem %s3, %s470
        %p472 = pneg %p126
        %p473 = pneg %p123
        %p474 = scmp.lt.s32.totalorder %s27, 3
        %s475 = scalar_select %p474, %s27, 3
        %s476 = smul.addr %s475, 4
        %s477 = smul.addr %s476, 8
        %s478 = scalar_lea.vmem %s4, %s477
        %p479 = pneg %p152
        %p480 = pneg %p149
        %p481 = scmp.lt.s32.totalorder %s27, 3
        %s482 = scalar_select %p481, %s27, 3
        %s483 = smul.addr %s482, 4
        %s484 = smul.addr %s483, 8
        %s485 = scalar_lea.vmem %s5, %s484
        %p486 = pneg %p178
        %p487 = pneg %p175
        %p488 = pneg %p199
        %p489 = pneg %p196
        %p490 = pneg %p220
        %p491 = pneg %p217
        %p492 = pneg %p241
        %p493 = pneg %p238
        %p494 = pneg %p262
        %p495 = pneg %p259
        %p496 = pneg %p283
        %p497 = pneg %p280
        %p498 = pneg %p304
        %p499 = pneg %p301
        %p500 = pneg %p325
        %p501 = pneg %p322
        %p502 = pneg %p351
        %p503 = pneg %p348
        %s504 = sand.u32 %s338, 1
        %s505 = scalar_lea.sflag [#allocation3], %s504
        %s506 = sand.u32 %s338, 1
        %s507 = smul.addr %s506, 16
        %s508 = scalar_lea.vmem [#allocation2], %s507
        %p509 = scmp.lt.s32.totalorder %s27, 3
        %s510 = scalar_select %p509, %s27, 3
        %s511 = smul.addr %s510, 2
        %s512 = smul.addr %s511, 8
        %s513 = scalar_lea.vmem %s0, %s512
        %p514 = scmp.lt.s32.totalorder %s27, 3
        %s515 = scalar_select %p514, %s27, 3
        %s516 = smul.addr %s515, 2
        %s517 = smul.addr %s516, 8
        %s518 = scalar_lea.vmem %s1, %s517
        %p519 = scmp.lt.s32.totalorder %s27, 3
        %s520 = scalar_select %p519, %s27, 3
        %s521 = smul.addr %s520, 4
        %s522 = smul.addr %s521, 8
        %s523 = scalar_lea.vmem %s2, %s522
        %p524 = scmp.lt.s32.totalorder %s27, 3
        %s525 = scalar_select %p524, %s27, 3
        %s526 = smul.addr %s525, 4
        %s527 = smul.addr %s526, 8
        %s528 = scalar_lea.vmem %s3, %s527
        %p529 = scmp.lt.s32.totalorder %s27, 3
        %s530 = scalar_select %p529, %s27, 3
        %s531 = smul.addr %s530, 4
        %s532 = smul.addr %s531, 8
        %s533 = scalar_lea.vmem %s4, %s532
        %p534 = scmp.lt.s32.totalorder %s27, 3
        %s535 = scalar_select %p534, %s27, 3
        %s536 = smul.addr %s535, 4
        %s537 = smul.addr %s536, 8
        %s538 = scalar_lea.vmem %s5, %s537
        %v539 = vld [vmem:[%s513] sm:$0xff]
        %v540 = vld [vmem:[%s513 + $0x8] sm:$0xff]
        %v541 = vld [vmem:[%s6] sm:$0xff]
        %v542 = vld [vmem:[%s6 + $0x8] sm:$0xff]
        %v543 = vld [vmem:[%s6 + $0x10] sm:$0xff]
        %v544 = vld [vmem:[%s6 + $0x18] sm:$0xff]
        %v545 = vld [vmem:[%s7] sm:$0x1]
        %v547 = vlaneseq
        %v548 = vshrl.u32 %v547, 7
        %v549 = vsub.s32 0, %v548
        %v550 = vrot.slane %v545, %v549
        %vm552 = vcmask 261120
        %v554 = vsel %vm552, %v539, 0
        %v557 = vsel %vm552, %v540, 0
        %559 = vmatprep.subr.mxu0 0.0
        %560 = vmatpush1.msra.mxu0 %v541
        %561 = vmatprep.subr.mxu0 0.0
        %562 = vmatpush1.msra.mxu0 %v542
        %563 = vmatprep.subr.mxu0 0.0
        %564 = vmatpush1.msra.mxu0 %v543
        %565 = vmatprep.subr.mxu0 0.0
        %566 = vmatpush1.msra.mxu0 %v544
        %567 = vmatprep.subr.mxu0 0.0
        %568 = vmatpush1.msra.mxu0 0.0
        %569 = vmatprep.subr.mxu0 0.0
        %570 = vmatpush1.msra.mxu0 0.0
        %571 = vmatprep.subr.mxu0 0.0
        %572 = vmatpush1.msra.mxu0 0.0
        %573 = vmatprep.subr.mxu0 0.0
        %574 = vmatpush1.msra.mxu0 0.0
        %575 = vmatprep.subr.mxu0 0.0
        %576 = vmatpush1.msra.mxu0 0.0
        %577 = vmatprep.subr.mxu0 0.0
        %578 = vmatpush1.msra.mxu0 0.0
        %579 = vmatprep.subr.mxu0 0.0
        %580 = vmatpush1.msra.mxu0 0.0
        %581 = vmatprep.subr.mxu0 0.0
        %582 = vmatpush1.msra.mxu0 0.0
        %583 = vmatprep.subr.mxu0 0.0
        %584 = vmatpush1.msra.mxu0 0.0
        %585 = vmatprep.subr.mxu0 0.0
        %586 = vmatpush1.msra.mxu0 0.0
        %587 = vmatprep.subr.mxu0 0.0
        %588 = vmatpush1.msra.mxu0 0.0
        %589 = vmatprep.subr.mxu0 0.0
        %590 = vmatpush1.msra.mxu0 0.0
        %591 = vmatprep.subr.mxu0 0.0
        %592 = vmatpush1.msra.mxu0 0.0
        %593 = vmatprep.subr.mxu0 0.0
        %594 = vmatpush1.msra.mxu0 0.0
        %595 = vmatprep.subr.mxu0 0.0
        %596 = vmatpush1.msra.mxu0 0.0
        %597 = vmatprep.subr.mxu0 0.0
        %598 = vmatpush1.msra.mxu0 0.0
        %599 = vmatprep.subr.mxu0 0.0
        %600 = vmatpush1.msra.mxu0 0.0
        %601 = vmatprep.subr.mxu0 0.0
        %602 = vmatpush1.msra.mxu0 0.0
        %603 = vmatprep.subr.mxu0 0.0
        %604 = vmatpush1.msra.mxu0 0.0
        %605 = vmatprep.subr.mxu0 0.0
        %606 = vmatpush1.msra.mxu0 0.0
        %607 = vmatprep.subr.mxu0 0.0
        %608 = vmatpush1.msra.mxu0 0.0
        %609 = vmatprep.subr.mxu0 0.0
        %610 = vmatpush1.msra.mxu0 0.0
        %611 = vmatprep.subr.mxu0 0.0
        %612 = vmatpush1.msra.mxu0 0.0
        %613 = vmatprep.subr.mxu0 0.0
        %614 = vmatpush1.msra.mxu0 0.0
        %615 = vmatprep.subr.mxu0 0.0
        %616 = vmatpush1.msra.mxu0 0.0
        %617 = vmatprep.subr.mxu0 0.0
        %618 = vmatpush1.msra.mxu0 0.0
        %619 = vmatprep.subr.mxu0 0.0
        %620 = vmatpush1.msra.mxu0 0.0
        %621 = vmatprep.subr.mxu0 0.0
        %622 = vmatpush1.msra.mxu0 0.0
        %623 = vmatprep.mubr.f32.mxu0 0.0
        %624 = vmatmul.mubr.f32.gmra.mrb[0].mxu0 %v554
        %v625 = vpop.f32.mrb[0].mxu0
        %v626 = vadd.f32 %v550, %v625
        %v627 = vpop.f32.mrb[0].mxu0
        %628 = vmatprep.mubr.f32.mxu0 0.0
        %629 = vmatmul.mubr.f32.gmra.mrb[0].mxu0 %v557
        %v630 = vpop.f32.mrb[0].mxu0
        %v631 = vadd.f32 %v550, %v630
        %v632 = vpop.f32.mrb[0].mxu0
        %633 = vdwg.mxu0
        %v634 = vlaneseq
        %v635 = vand.u32 %v634, 127
        %v636 = vld [vmem:[%s523] sm:$0xff]
        %v637 = vld [vmem:[%s523 + $0x8] sm:$0xff]
        %v638 = vld [vmem:[%s523 + $0x10] sm:$0xff]
        %v639 = vld [vmem:[%s523 + $0x18] sm:$0xff]
        %640 = vset.pattern.permute.xlu0 0
        %641 = vperm.xlu0 %640, %v636
        %v642 = vpop.permute.xlu0 %641
        %643 = vset.pattern.permute.xlu0 0
        %644 = vperm.xlu0 %643, %v637
        %v645 = vpop.permute.xlu0 %644
        %646 = vset.pattern.permute.xlu0 0
        %647 = vperm.xlu0 %646, %v638
        %v648 = vpop.permute.xlu0 %647
        %649 = vset.pattern.permute.xlu0 0
        %650 = vperm.xlu0 %649, %v639
        %v651 = vpop.permute.xlu0 %650
        %vm652 = vcmp.eq.s32.totalorder %v635, %v642
        %vm653 = vcmp.eq.s32.totalorder %v635, %v645
        %vm654 = vcmp.eq.s32.totalorder %v635, %v648
        %vm655 = vcmp.eq.s32.totalorder %v635, %v651
        %v656 = vsel %vm652, 1, 0
        %v657 = vsel %vm653, 1, 0
        %v658 = vsel %vm654, 1, 0
        %v659 = vsel %vm655, 1, 0
        %v660 = vcvt.s32.f32 %v656
        %v661 = vcvt.s32.f32 %v657
        %v662 = vcvt.s32.f32 %v658
        %v663 = vcvt.s32.f32 %v659
        %v664 = vld [vmem:[%s528] sm:$0xff]
        %v665 = vld [vmem:[%s528 + $0x8] sm:$0xff]
        %v666 = vld [vmem:[%s528 + $0x10] sm:$0xff]
        %v667 = vld [vmem:[%s528 + $0x18] sm:$0xff]
        %668 = vset.pattern.permute.xlu0 0
        %669 = vperm.xlu0 %668, %v664
        %v670 = vpop.permute.xlu0 %669
        %671 = vset.pattern.permute.xlu0 0
        %672 = vperm.xlu0 %671, %v665
        %v673 = vpop.permute.xlu0 %672
        %674 = vset.pattern.permute.xlu0 0
        %675 = vperm.xlu0 %674, %v666
        %v676 = vpop.permute.xlu0 %675
        %677 = vset.pattern.permute.xlu0 0
        %678 = vperm.xlu0 %677, %v667
        %v679 = vpop.permute.xlu0 %678
        %vm680 = vcmp.eq.s32.totalorder %v635, %v670
        %vm681 = vcmp.eq.s32.totalorder %v635, %v673
        %vm682 = vcmp.eq.s32.totalorder %v635, %v676
        %vm683 = vcmp.eq.s32.totalorder %v635, %v679
        %v684 = vsel %vm680, 1, 0
        %v685 = vsel %vm681, 1, 0
        %v686 = vsel %vm682, 1, 0
        %v687 = vsel %vm683, 1, 0
        %v688 = vcvt.s32.f32 %v684
        %v689 = vcvt.s32.f32 %v685
        %v690 = vcvt.s32.f32 %v686
        %v691 = vcvt.s32.f32 %v687
        %v692 = vld [vmem:[%s518] sm:$0xff]
        %v693 = vld [vmem:[%s518 + $0x8] sm:$0xff]
        %695 = vset.pattern.permute.xlu0 0
        %696 = vperm.xlu0 %695, %v692
        %v697 = vpop.permute.xlu0 %696
        %700 = vset.pattern.permute.xlu0 0
        %701 = vperm.xlu0 %700, %v693
        %v702 = vpop.permute.xlu0 %701
        %v704 = vmul.f32 %v697, %v626
        %v705 = vmul.f32 %v702, %v631
        %v706 = vadd.f32 %v660, %v688
        %v707 = vadd.f32 %v661, %v689
        %v708 = vadd.f32 %v662, %v690
        %v709 = vadd.f32 %v663, %v691
        %vm710 = vcmask 130048
        %v712 = vsel %vm710, %v706, 0
        %v715 = vsel %vm710, %v707, 0
        %v718 = vsel %vm710, %v708, 0
        %v721 = vsel %vm710, %v709, 0
        %723 = vmatprep.subr.mxu0 0.0
        %724 = vmatpush1.msra.mxu0 %v704
        %725 = vmatprep.subr.mxu0 0.0
        %726 = vmatpush1.msra.mxu0 %v705
        %727 = vmatprep.subr.mxu0 0.0
        %728 = vmatpush1.msra.mxu0 0.0
        %729 = vmatprep.subr.mxu0 0.0
        %730 = vmatpush1.msra.mxu0 0.0
        %731 = vmatprep.subr.mxu0 0.0
        %732 = vmatpush1.msra.mxu0 0.0
        %733 = vmatprep.subr.mxu0 0.0
        %734 = vmatpush1.msra.mxu0 0.0
        %735 = vmatprep.subr.mxu0 0.0
        %736 = vmatpush1.msra.mxu0 0.0
        %737 = vmatprep.subr.mxu0 0.0
        %738 = vmatpush1.msra.mxu0 0.0
        %739 = vmatprep.subr.mxu0 0.0
        %740 = vmatpush1.msra.mxu0 0.0
        %741 = vmatprep.subr.mxu0 0.0
        %742 = vmatpush1.msra.mxu0 0.0
        %743 = vmatprep.subr.mxu0 0.0
        %744 = vmatpush1.msra.mxu0 0.0
        %745 = vmatprep.subr.mxu0 0.0
        %746 = vmatpush1.msra.mxu0 0.0
        %747 = vmatprep.subr.mxu0 0.0
        %748 = vmatpush1.msra.mxu0 0.0
        %749 = vmatprep.subr.mxu0 0.0
        %750 = vmatpush1.msra.mxu0 0.0
        %751 = vmatprep.subr.mxu0 0.0
        %752 = vmatpush1.msra.mxu0 0.0
        %753 = vmatprep.subr.mxu0 0.0
        %754 = vmatpush1.msra.mxu0 0.0
        %755 = vmatprep.subr.mxu0 0.0
        %756 = vmatpush1.msra.mxu0 0.0
        %757 = vmatprep.subr.mxu0 0.0
        %758 = vmatpush1.msra.mxu0 0.0
        %759 = vmatprep.subr.mxu0 0.0
        %760 = vmatpush1.msra.mxu0 0.0
        %761 = vmatprep.subr.mxu0 0.0
        %762 = vmatpush1.msra.mxu0 0.0
        %763 = vmatprep.subr.mxu0 0.0
        %764 = vmatpush1.msra.mxu0 0.0
        %765 = vmatprep.subr.mxu0 0.0
        %766 = vmatpush1.msra.mxu0 0.0
        %767 = vmatprep.subr.mxu0 0.0
        %768 = vmatpush1.msra.mxu0 0.0
        %769 = vmatprep.subr.mxu0 0.0
        %770 = vmatpush1.msra.mxu0 0.0
        %771 = vmatprep.subr.mxu0 0.0
        %772 = vmatpush1.msra.mxu0 0.0
        %773 = vmatprep.subr.mxu0 0.0
        %774 = vmatpush1.msra.mxu0 0.0
        %775 = vmatprep.subr.mxu0 0.0
        %776 = vmatpush1.msra.mxu0 0.0
        %777 = vmatprep.subr.mxu0 0.0
        %778 = vmatpush1.msra.mxu0 0.0
        %779 = vmatprep.subr.mxu0 0.0
        %780 = vmatpush1.msra.mxu0 0.0
        %781 = vmatprep.subr.mxu0 0.0
        %782 = vmatpush1.msra.mxu0 0.0
        %783 = vmatprep.subr.mxu0 0.0
        %784 = vmatpush1.msra.mxu0 0.0
        %785 = vmatprep.subr.mxu0 0.0
        %786 = vmatpush1.msra.mxu0 0.0
        %787 = vmatprep.mubr.f32.mxu0 0.0
        %788 = vmatmul.mubr.f32.gmra.mrb[0].mxu0 %v712
        %v789 = vpop.f32.mrb[0].mxu0
        %v790 = vadd.f32 0.0, %v789
        %v791 = vpop.f32.mrb[0].mxu0
        %792 = vmatprep.mubr.f32.mxu0 0.0
        %793 = vmatmul.mubr.f32.gmra.mrb[0].mxu0 %v715
        %v794 = vpop.f32.mrb[0].mxu0
        %v795 = vadd.f32 0.0, %v794
        %v796 = vpop.f32.mrb[0].mxu0
        %797 = vmatprep.mubr.f32.mxu0 0.0
        %798 = vmatmul.mubr.f32.gmra.mrb[0].mxu0 %v718
        %v799 = vpop.f32.mrb[0].mxu0
        %v800 = vadd.f32 0.0, %v799
        %v801 = vpop.f32.mrb[0].mxu0
        %802 = vmatprep.mubr.f32.mxu0 0.0
        %803 = vmatmul.mubr.f32.gmra.mrb[0].mxu0 %v721
        %v804 = vpop.f32.mrb[0].mxu0
        %v805 = vadd.f32 0.0, %v804
        %v806 = vpop.f32.mrb[0].mxu0
        %807 = vdwg.mxu0
        %v808 = vld [vmem:[%s533] sm:$0xff]
        %v809 = vld [vmem:[%s533 + $0x8] sm:$0xff]
        %v810 = vld [vmem:[%s533 + $0x10] sm:$0xff]
        %v811 = vld [vmem:[%s533 + $0x18] sm:$0xff]
        %v812 = vld [vmem:[%s8] sm:$0xff]
        %v813 = vld [vmem:[%s8 + $0x8] sm:$0xff]
        %v814 = vld [vmem:[%s9] sm:$0x1]
        %v816 = vlaneseq
        %v817 = vshrl.u32 %v816, 7
        %v818 = vsub.s32 0, %v817
        %v819 = vrot.slane %v814, %v818
        %v822 = vsel %vm710, %v808, 0
        %v825 = vsel %vm710, %v809, 0
        %v828 = vsel %vm710, %v810, 0
        %v831 = vsel %vm710, %v811, 0
        %833 = vmatprep.subr.mxu0 0.0
        %834 = vmatpush1.msra.mxu0 %v812
        %835 = vmatprep.subr.mxu0 0.0
        %836 = vmatpush1.msra.mxu0 %v813
        %837 = vmatprep.subr.mxu0 0.0
        %838 = vmatpush1.msra.mxu0 0.0
        %839 = vmatprep.subr.mxu0 0.0
        %840 = vmatpush1.msra.mxu0 0.0
        %841 = vmatprep.subr.mxu0 0.0
        %842 = vmatpush1.msra.mxu0 0.0
        %843 = vmatprep.subr.mxu0 0.0
        %844 = vmatpush1.msra.mxu0 0.0
        %845 = vmatprep.subr.mxu0 0.0
        %846 = vmatpush1.msra.mxu0 0.0
        %847 = vmatprep.subr.mxu0 0.0
        %848 = vmatpush1.msra.mxu0 0.0
        %849 = vmatprep.subr.mxu0 0.0
        %850 = vmatpush1.msra.mxu0 0.0
        %851 = vmatprep.subr.mxu0 0.0
        %852 = vmatpush1.msra.mxu0 0.0
        %853 = vmatprep.subr.mxu0 0.0
        %854 = vmatpush1.msra.mxu0 0.0
        %855 = vmatprep.subr.mxu0 0.0
        %856 = vmatpush1.msra.mxu0 0.0
        %857 = vmatprep.subr.mxu0 0.0
        %858 = vmatpush1.msra.mxu0 0.0
        %859 = vmatprep.subr.mxu0 0.0
        %860 = vmatpush1.msra.mxu0 0.0
        %861 = vmatprep.subr.mxu0 0.0
        %862 = vmatpush1.msra.mxu0 0.0
        %863 = vmatprep.subr.mxu0 0.0
        %864 = vmatpush1.msra.mxu0 0.0
        %865 = vmatprep.subr.mxu0 0.0
        %866 = vmatpush1.msra.mxu0 0.0
        %867 = vmatprep.subr.mxu0 0.0
        %868 = vmatpush1.msra.mxu0 0.0
        %869 = vmatprep.subr.mxu0 0.0
        %870 = vmatpush1.msra.mxu0 0.0
        %871 = vmatprep.subr.mxu0 0.0
        %872 = vmatpush1.msra.mxu0 0.0
        %873 = vmatprep.subr.mxu0 0.0
        %874 = vmatpush1.msra.mxu0 0.0
        %875 = vmatprep.subr.mxu0 0.0
        %876 = vmatpush1.msra.mxu0 0.0
        %877 = vmatprep.subr.mxu0 0.0
        %878 = vmatpush1.msra.mxu0 0.0
        %879 = vmatprep.subr.mxu0 0.0
        %880 = vmatpush1.msra.mxu0 0.0
        %881 = vmatprep.subr.mxu0 0.0
        %882 = vmatpush1.msra.mxu0 0.0
        %883 = vmatprep.subr.mxu0 0.0
        %884 = vmatpush1.msra.mxu0 0.0
        %885 = vmatprep.subr.mxu0 0.0
        %886 = vmatpush1.msra.mxu0 0.0
        %887 = vmatprep.subr.mxu0 0.0
        %888 = vmatpush1.msra.mxu0 0.0
        %889 = vmatprep.subr.mxu0 0.0
        %890 = vmatpush1.msra.mxu0 0.0
        %891 = vmatprep.subr.mxu0 0.0
        %892 = vmatpush1.msra.mxu0 0.0
        %893 = vmatprep.subr.mxu0 0.0
        %894 = vmatpush1.msra.mxu0 0.0
        %895 = vmatprep.subr.mxu0 0.0
        %896 = vmatpush1.msra.mxu0 0.0
        %897 = vmatprep.mubr.f32.mxu0 0.0
        %898 = vmatmul.mubr.f32.gmra.mrb[0].mxu0 %v822
        %v899 = vpop.f32.mrb[0].mxu0
        %v900 = vadd.f32 %v819, %v899
        %v901 = vpop.f32.mrb[0].mxu0
        %902 = vmatprep.mubr.f32.mxu0 0.0
        %903 = vmatmul.mubr.f32.gmra.mrb[0].mxu0 %v825
        %v904 = vpop.f32.mrb[0].mxu0
        %v905 = vadd.f32 %v819, %v904
        %v906 = vpop.f32.mrb[0].mxu0
        %907 = vmatprep.mubr.f32.mxu0 0.0
        %908 = vmatmul.mubr.f32.gmra.mrb[0].mxu0 %v828
        %v909 = vpop.f32.mrb[0].mxu0
        %v910 = vadd.f32 %v819, %v909
        %v911 = vpop.f32.mrb[0].mxu0
        %912 = vmatprep.mubr.f32.mxu0 0.0
        %913 = vmatmul.mubr.f32.gmra.mrb[0].mxu0 %v831
        %v914 = vpop.f32.mrb[0].mxu0
        %v915 = vadd.f32 %v819, %v914
        %v916 = vpop.f32.mrb[0].mxu0
        %917 = vdwg.mxu0
        %v918 = vld [vmem:[%s538] sm:$0xff]
        %v919 = vld [vmem:[%s538 + $0x8] sm:$0xff]
        %v920 = vld [vmem:[%s538 + $0x10] sm:$0xff]
        %v921 = vld [vmem:[%s538 + $0x18] sm:$0xff]
        %923 = vset.pattern.permute.xlu0 0
        %924 = vperm.xlu0 %923, %v918
        %v925 = vpop.permute.xlu0 %924
        %928 = vset.pattern.permute.xlu0 0
        %929 = vperm.xlu0 %928, %v919
        %v930 = vpop.permute.xlu0 %929
        %933 = vset.pattern.permute.xlu0 0
        %934 = vperm.xlu0 %933, %v920
        %v935 = vpop.permute.xlu0 %934
        %938 = vset.pattern.permute.xlu0 0
        %939 = vperm.xlu0 %938, %v921
        %v940 = vpop.permute.xlu0 %939
        %v942 = vmul.f32 %v925, %v900
        %v943 = vmul.f32 %v930, %v905
        %v944 = vmul.f32 %v935, %v910
        %v945 = vmul.f32 %v940, %v915
        %950 = vrot.lane.b32.xlu0 %v942, 32
        %v951 = vpop.permute.xlu0 %950
        %952 = vrot.lane.b32.xlu0 %v943, 32
        %v953 = vpop.permute.xlu0 %952
        %954 = vrot.lane.b32.xlu0 %v944, 32
        %v955 = vpop.permute.xlu0 %954
        %956 = vrot.lane.b32.xlu0 %v945, 32
        %v957 = vpop.permute.xlu0 %956
        %v962 = vsel %vm552, %v790, %v951
        %v963 = vsel %vm552, %v795, %v953
        %v964 = vsel %vm552, %v800, %v955
        %v965 = vsel %vm552, %v805, %v957
        %966 = vxpose.xlu0.b32.start [1/16] %v688, 128
        %967 = vxpose.xlu0.b32.cont [2/16] %v689, 128
        %968 = vxpose.xlu0.b32.cont [3/16] %v690, 128
        %969 = vxpose.xlu0.b32.cont [4/16] %v691, 128
        %970 = vxpose.xlu0.b32.cont [5/16] 0.0, 128
        %971 = vxpose.xlu0.b32.cont [6/16] 0.0, 128
        %972 = vxpose.xlu0.b32.cont [7/16] 0.0, 128
        %973 = vxpose.xlu0.b32.cont [8/16] 0.0, 128
        %974 = vxpose.xlu0.b32.cont [9/16] 0.0, 128
        %975 = vxpose.xlu0.b32.cont [10/16] 0.0, 128
        %976 = vxpose.xlu0.b32.cont [11/16] 0.0, 128
        %977 = vxpose.xlu0.b32.cont [12/16] 0.0, 128
        %978 = vxpose.xlu0.b32.cont [13/16] 0.0, 128
        %979 = vxpose.xlu0.b32.cont [14/16] 0.0, 128
        %980 = vxpose.xlu0.b32.cont [15/16] 0.0, 128
        %981 = vxpose.xlu0.b32.end [16/16] 0.0, 128
        %v982 = vpop.trf.xlu0
        %v983 = vpop.trf.xlu0
        %v984 = vpop.trf.xlu0
        %v985 = vpop.trf.xlu0
        %v986 = vpop.trf.xlu0
        %v987 = vpop.trf.xlu0
        %v988 = vpop.trf.xlu0
        %v989 = vpop.trf.xlu0
        %v990 = vpop.trf.xlu0
        %v991 = vpop.trf.xlu0
        %v992 = vpop.trf.xlu0
        %v993 = vpop.trf.xlu0
        %v994 = vpop.trf.xlu0
        %v995 = vpop.trf.xlu0
        %v996 = vpop.trf.xlu0
        %v997 = vpop.trf.xlu0
        %v999 = vsel %vm552, %v982, 0
        %v1002 = vsel %vm552, %v983, 0
        %1004 = vmatprep.subr.mxu0 0.0
        %1005 = vmatpush1.msra.mxu0 %v962
        %1006 = vmatprep.subr.mxu0 0.0
        %1007 = vmatpush1.msra.mxu0 %v963
        %1008 = vmatprep.subr.mxu0 0.0
        %1009 = vmatpush1.msra.mxu0 %v964
        %1010 = vmatprep.subr.mxu0 0.0
        %1011 = vmatpush1.msra.mxu0 %v965
        %1012 = vmatprep.subr.mxu0 0.0
        %1013 = vmatpush1.msra.mxu0 0.0
        %1014 = vmatprep.subr.mxu0 0.0
        %1015 = vmatpush1.msra.mxu0 0.0
        %1016 = vmatprep.subr.mxu0 0.0
        %1017 = vmatpush1.msra.mxu0 0.0
        %1018 = vmatprep.subr.mxu0 0.0
        %1019 = vmatpush1.msra.mxu0 0.0
        %1020 = vmatprep.subr.mxu0 0.0
        %1021 = vmatpush1.msra.mxu0 0.0
        %1022 = vmatprep.subr.mxu0 0.0
        %1023 = vmatpush1.msra.mxu0 0.0
        %1024 = vmatprep.subr.mxu0 0.0
        %1025 = vmatpush1.msra.mxu0 0.0
        %1026 = vmatprep.subr.mxu0 0.0
        %1027 = vmatpush1.msra.mxu0 0.0
        %1028 = vmatprep.subr.mxu0 0.0
        %1029 = vmatpush1.msra.mxu0 0.0
        %1030 = vmatprep.subr.mxu0 0.0
        %1031 = vmatpush1.msra.mxu0 0.0
        %1032 = vmatprep.subr.mxu0 0.0
        %1033 = vmatpush1.msra.mxu0 0.0
        %1034 = vmatprep.subr.mxu0 0.0
        %1035 = vmatpush1.msra.mxu0 0.0
        %1036 = vmatprep.subr.mxu0 0.0
        %1037 = vmatpush1.msra.mxu0 0.0
        %1038 = vmatprep.subr.mxu0 0.0
        %1039 = vmatpush1.msra.mxu0 0.0
        %1040 = vmatprep.subr.mxu0 0.0
        %1041 = vmatpush1.msra.mxu0 0.0
        %1042 = vmatprep.subr.mxu0 0.0
        %1043 = vmatpush1.msra.mxu0 0.0
        %1044 = vmatprep.subr.mxu0 0.0
        %1045 = vmatpush1.msra.mxu0 0.0
        %1046 = vmatprep.subr.mxu0 0.0
        %1047 = vmatpush1.msra.mxu0 0.0
        %1048 = vmatprep.subr.mxu0 0.0
        %1049 = vmatpush1.msra.mxu0 0.0
        %1050 = vmatprep.subr.mxu0 0.0
        %1051 = vmatpush1.msra.mxu0 0.0
        %1052 = vmatprep.subr.mxu0 0.0
        %1053 = vmatpush1.msra.mxu0 0.0
        %1054 = vmatprep.subr.mxu0 0.0
        %1055 = vmatpush1.msra.mxu0 0.0
        %1056 = vmatprep.subr.mxu0 0.0
        %1057 = vmatpush1.msra.mxu0 0.0
        %1058 = vmatprep.subr.mxu0 0.0
        %1059 = vmatpush1.msra.mxu0 0.0
        %1060 = vmatprep.subr.mxu0 0.0
        %1061 = vmatpush1.msra.mxu0 0.0
        %1062 = vmatprep.subr.mxu0 0.0
        %1063 = vmatpush1.msra.mxu0 0.0
        %1064 = vmatprep.subr.mxu0 0.0
        %1065 = vmatpush1.msra.mxu0 0.0
        %1066 = vmatprep.subr.mxu0 0.0
        %1067 = vmatpush1.msra.mxu0 0.0
        %1068 = vmatprep.mubr.f32.mxu0 0.0
        %1069 = vmatmul.mubr.f32.gmra.mrb[0].mxu0 %v999
        %v1070 = vpop.f32.mrb[0].mxu0
        %v1071 = vadd.f32 0.0, %v1070
        %v1072 = vpop.f32.mrb[0].mxu0
        %1073 = vmatprep.mubr.f32.mxu0 0.0
        %1074 = vmatmul.mubr.f32.gmra.mrb[0].mxu0 %v1002
        %v1075 = vpop.f32.mrb[0].mxu0
        %v1076 = vadd.f32 0.0, %v1075
        %v1077 = vpop.f32.mrb[0].mxu0
        %1078 = vdwg.mxu0
        %v1079 = vld [vmem:[%s10] sm:$0xff]
        %v1080 = vld [vmem:[%s10 + $0x8] sm:$0xff]
        %v1081 = vld [vmem:[%s10 + $0x10] sm:$0xff]
        %v1082 = vld [vmem:[%s10 + $0x18] sm:$0xff]
        %v1083 = vld [vmem:[%s11] sm:$0xff]
        %v1084 = vld [vmem:[%s11 + $0x8] sm:$0xff]
        %v1085 = vld [vmem:[%s11 + $0x10] sm:$0xff]
        %v1086 = vld [vmem:[%s11 + $0x18] sm:$0xff]
        %v1087 = vld [vmem:[%s11 + $0x20] sm:$0xff]
        %v1088 = vld [vmem:[%s11 + $0x28] sm:$0xff]
        %vm1089 = vcmask 392192
        %v1091 = vsel %vm1089, %v1071, 0
        %v1094 = vsel %vm1089, %v1076, 0
        %1096 = vmatprep.subr.mxu0 0.0
        %1097 = vmatpush1.msra.mxu0 %v1083
        %1098 = vmatprep.subr.mxu0 0.0
        %1099 = vmatpush1.msra.mxu0 %v1084
        %1100 = vmatprep.subr.mxu0 0.0
        %1101 = vmatpush1.msra.mxu0 %v1085
        %1102 = vmatprep.subr.mxu0 0.0
        %1103 = vmatpush1.msra.mxu0 %v1086
        %1104 = vmatprep.subr.mxu0 0.0
        %1105 = vmatpush1.msra.mxu0 %v1087
        %1106 = vmatprep.subr.mxu0 0.0
        %1107 = vmatpush1.msra.mxu0 %v1088
        %1108 = vmatprep.subr.mxu0 0.0
        %1109 = vmatpush1.msra.mxu0 0.0
        %1110 = vmatprep.subr.mxu0 0.0
        %1111 = vmatpush1.msra.mxu0 0.0
        %1112 = vmatprep.subr.mxu0 0.0
        %1113 = vmatpush1.msra.mxu0 0.0
        %1114 = vmatprep.subr.mxu0 0.0
        %1115 = vmatpush1.msra.mxu0 0.0
        %1116 = vmatprep.subr.mxu0 0.0
        %1117 = vmatpush1.msra.mxu0 0.0
        %1118 = vmatprep.subr.mxu0 0.0
        %1119 = vmatpush1.msra.mxu0 0.0
        %1120 = vmatprep.subr.mxu0 0.0
        %1121 = vmatpush1.msra.mxu0 0.0
        %1122 = vmatprep.subr.mxu0 0.0
        %1123 = vmatpush1.msra.mxu0 0.0
        %1124 = vmatprep.subr.mxu0 0.0
        %1125 = vmatpush1.msra.mxu0 0.0
        %1126 = vmatprep.subr.mxu0 0.0
        %1127 = vmatpush1.msra.mxu0 0.0
        %1128 = vmatprep.subr.mxu0 0.0
        %1129 = vmatpush1.msra.mxu0 0.0
        %1130 = vmatprep.subr.mxu0 0.0
        %1131 = vmatpush1.msra.mxu0 0.0
        %1132 = vmatprep.subr.mxu0 0.0
        %1133 = vmatpush1.msra.mxu0 0.0
        %1134 = vmatprep.subr.mxu0 0.0
        %1135 = vmatpush1.msra.mxu0 0.0
        %1136 = vmatprep.subr.mxu0 0.0
        %1137 = vmatpush1.msra.mxu0 0.0
        %1138 = vmatprep.subr.mxu0 0.0
        %1139 = vmatpush1.msra.mxu0 0.0
        %1140 = vmatprep.subr.mxu0 0.0
        %1141 = vmatpush1.msra.mxu0 0.0
        %1142 = vmatprep.subr.mxu0 0.0
        %1143 = vmatpush1.msra.mxu0 0.0
        %1144 = vmatprep.subr.mxu0 0.0
        %1145 = vmatpush1.msra.mxu0 0.0
        %1146 = vmatprep.subr.mxu0 0.0
        %1147 = vmatpush1.msra.mxu0 0.0
        %1148 = vmatprep.subr.mxu0 0.0
        %1149 = vmatpush1.msra.mxu0 0.0
        %1150 = vmatprep.subr.mxu0 0.0
        %1151 = vmatpush1.msra.mxu0 0.0
        %1152 = vmatprep.subr.mxu0 0.0
        %1153 = vmatpush1.msra.mxu0 0.0
        %1154 = vmatprep.subr.mxu0 0.0
        %1155 = vmatpush1.msra.mxu0 0.0
        %1156 = vmatprep.subr.mxu0 0.0
        %1157 = vmatpush1.msra.mxu0 0.0
        %1158 = vmatprep.subr.mxu0 0.0
        %1159 = vmatpush1.msra.mxu0 0.0
        %1160 = vmatprep.mubr.f32.mxu0 0.0
        %1161 = vmatmul.mubr.f32.gmra.mrb[0].mxu0 %v1091
        %v1162 = vpop.f32.mrb[0].mxu0
        %v1163 = vadd.f32 0.0, %v1162
        %v1164 = vpop.f32.mrb[0].mxu0
        %1165 = vmatprep.mubr.f32.mxu0 0.0
        %1166 = vmatmul.mubr.f32.gmra.mrb[0].mxu0 %v1094
        %v1167 = vpop.f32.mrb[0].mxu0
        %v1168 = vadd.f32 0.0, %v1167
        %v1169 = vpop.f32.mrb[0].mxu0
        %1170 = vdwg.mxu0
        %v1172 = vsel %vm552, %v626, 0
        %v1175 = vsel %vm552, %v631, 0
        %1177 = vmatprep.subr.mxu0 0.0
        %1178 = vmatpush1.msra.mxu0 %v1079
        %1179 = vmatprep.subr.mxu0 0.0
        %1180 = vmatpush1.msra.mxu0 %v1080
        %1181 = vmatprep.subr.mxu0 0.0
        %1182 = vmatpush1.msra.mxu0 %v1081
        %1183 = vmatprep.subr.mxu0 0.0
        %1184 = vmatpush1.msra.mxu0 %v1082
        %1185 = vmatprep.subr.mxu0 0.0
        %1186 = vmatpush1.msra.mxu0 0.0
        %1187 = vmatprep.subr.mxu0 0.0
        %1188 = vmatpush1.msra.mxu0 0.0
        %1189 = vmatprep.subr.mxu0 0.0
        %1190 = vmatpush1.msra.mxu0 0.0
        %1191 = vmatprep.subr.mxu0 0.0
        %1192 = vmatpush1.msra.mxu0 0.0
        %1193 = vmatprep.subr.mxu0 0.0
        %1194 = vmatpush1.msra.mxu0 0.0
        %1195 = vmatprep.subr.mxu0 0.0
        %1196 = vmatpush1.msra.mxu0 0.0
        %1197 = vmatprep.subr.mxu0 0.0
        %1198 = vmatpush1.msra.mxu0 0.0
        %1199 = vmatprep.subr.mxu0 0.0
        %1200 = vmatpush1.msra.mxu0 0.0
        %1201 = vmatprep.subr.mxu0 0.0
        %1202 = vmatpush1.msra.mxu0 0.0
        %1203 = vmatprep.subr.mxu0 0.0
        %1204 = vmatpush1.msra.mxu0 0.0
        %1205 = vmatprep.subr.mxu0 0.0
        %1206 = vmatpush1.msra.mxu0 0.0
        %1207 = vmatprep.subr.mxu0 0.0
        %1208 = vmatpush1.msra.mxu0 0.0
        %1209 = vmatprep.subr.mxu0 0.0
        %1210 = vmatpush1.msra.mxu0 0.0
        %1211 = vmatprep.subr.mxu0 0.0
        %1212 = vmatpush1.msra.mxu0 0.0
        %1213 = vmatprep.subr.mxu0 0.0
        %1214 = vmatpush1.msra.mxu0 0.0
        %1215 = vmatprep.subr.mxu0 0.0
        %1216 = vmatpush1.msra.mxu0 0.0
        %1217 = vmatprep.subr.mxu0 0.0
        %1218 = vmatpush1.msra.mxu0 0.0
        %1219 = vmatprep.subr.mxu0 0.0
        %1220 = vmatpush1.msra.mxu0 0.0
        %1221 = vmatprep.subr.mxu0 0.0
        %1222 = vmatpush1.msra.mxu0 0.0
        %1223 = vmatprep.subr.mxu0 0.0
        %1224 = vmatpush1.msra.mxu0 0.0
        %1225 = vmatprep.subr.mxu0 0.0
        %1226 = vmatpush1.msra.mxu0 0.0
        %1227 = vmatprep.subr.mxu0 0.0
        %1228 = vmatpush1.msra.mxu0 0.0
        %1229 = vmatprep.subr.mxu0 0.0
        %1230 = vmatpush1.msra.mxu0 0.0
        %1231 = vmatprep.subr.mxu0 0.0
        %1232 = vmatpush1.msra.mxu0 0.0
        %1233 = vmatprep.subr.mxu0 0.0
        %1234 = vmatpush1.msra.mxu0 0.0
        %1235 = vmatprep.subr.mxu0 0.0
        %1236 = vmatpush1.msra.mxu0 0.0
        %1237 = vmatprep.subr.mxu0 0.0
        %1238 = vmatpush1.msra.mxu0 0.0
        %1239 = vmatprep.subr.mxu0 0.0
        %1240 = vmatpush1.msra.mxu0 0.0
        %1241 = vmatprep.mubr.f32.mxu0 0.0
        %1242 = vmatmul.mubr.f32.gmra.mrb[0].mxu0 %v1172
        %v1243 = vpop.f32.mrb[0].mxu0
        %v1244 = vadd.f32 %v1163, %v1243
        %v1245 = vpop.f32.mrb[0].mxu0
        %1246 = vmatprep.mubr.f32.mxu0 0.0
        %1247 = vmatmul.mubr.f32.gmra.mrb[0].mxu0 %v1175
        %v1248 = vpop.f32.mrb[0].mxu0
        %v1249 = vadd.f32 %v1168, %v1248
        %v1250 = vpop.f32.mrb[0].mxu0
        %1251 = vdwg.mxu0
        %v1252 = vld [vmem:[%s12] sm:$0x1]
        %v1254 = vlaneseq
        %v1255 = vshrl.u32 %v1254, 7
        %v1256 = vsub.s32 0, %v1255
        %v1257 = vrot.slane %v1252, %v1256
        %v1259 = vadd.f32 %v1244, %v1257
        %v1260 = vadd.f32 %v1249, %v1257
        %v1261 = vmax.f32 %v1259, 0.0
        %v1262 = vmax.f32 %v1260, 0.0
        %1263 = vst [vmem:[%s508] sm:$0xff] %v1261
        %1264 = vst [vmem:[%s508 + $0x8] sm:$0xff] %v1262
        %s1265 = sand.u32 %s338, 1
        %s1266 = scalar_lea.sflag [#allocation3], %s1265
        %s1267 = sand.u32 %s338, 1
        %s1268 = smul.addr %s1267, 16
        %s1269 = scalar_lea.vmem [#allocation2], %s1268
        // Predicated region
        $region73: #{tpu_custom_call.1} parent=71 // pred_check
          %p1270 = pneg %p348
        $region74: #{tpu_custom_call.1} parent=71 // pred_check_branch
          %1272 = sbr.rel (%p1270) target = $region76
        $region75: #{tpu_custom_call.1} parent=71 // pred_region
          %s1274 = ssub.s32 256, 256
          %1275 = vsyncadd %s1266, %s1274
          %s1276 = smul.addr %s27, 2
          %s1277 = smul.addr %s1276, 128
          %s1278 = scalar_lea.hbm %s13, %s1277
          %s1279 = sshll.u32 %s1269, 4
          %s1280 = int_to_ptr.vmem [resolvable:$true] %s1279
          %1285 = dma.vmem_to_hbm [thread:$0]  %s1280, 256, %s1278, %s1266, 128, 128, 8
        $region76: #{tpu_custom_call.1} parent=71 // pred_fallthru
          _
      $region72: #{tpu_custom_call.1} parent=5 // pred_fallthru
        _
      %p1286 = scmp.le.s32.totalorder 2, %s22
      // Predicated region
      $region77: #{tpu_custom_call.1} parent=5 // pred_check
        %p1287 = pneg %p1286
      $region78: #{tpu_custom_call.1} parent=5 // pred_check_branch
        %1289 = sbr.rel (%p1287) target = $region80
      $region79: #{tpu_custom_call.1} parent=5 // pred_region
        %s1290 = ssub.s32 %s22, 2
        // Predicated region
        $region81: #{tpu_custom_call.1} parent=79 // pred_check
          %p1291 = pneg %p354
        $region82: #{tpu_custom_call.1} parent=79 // pred_check_branch
          %1293 = sbr.rel (%p1291) target = $region84
        $region83: #{tpu_custom_call.1} parent=79 // pred_region
          %s1294 = sand.u32 %s339, 1
          %s1295 = scalar_lea.sflag [#allocation3], %s1294
          %s1296 = sand.u32 %s339, 1
          %s1297 = smul.addr %s1296, 16
          %s1298 = scalar_lea.vmem [#allocation2], %s1297
          %1299 = dma.done %s1295, 256
        $region84: #{tpu_custom_call.1} parent=79 // pred_fallthru
          _
      $region80: #{tpu_custom_call.1} parent=5 // pred_fallthru
        _
    $region6: #{tpu_custom_call.1} parent=1 // loop_footer
      %s26 = sadd.s32 1, %s22
    $region7: #{tpu_custom_call.1} parent=1 // loop_footer_branch
      %21 = sbr.rel target = $region3
    $region8: #{tpu_custom_call.1} parent=1 // loop_exit
      _
    %1300 = vsyncpa [#allocation3], 1
    %s1301 = scalar_lea.sflag [#allocation3], 1
    %1302 = vsyncpa %s1301, 1

</llo_original>
